<compile_context>
chip_gen: v6e
topology: v6e:2x2x1
jax: 0.10.0
libtpu: 0.0.40
codegen_flags: <defaults>
</compile_context>

<pallas_src>
import functools

import jax
import jax.numpy as jnp
from jax.experimental import pallas as pl
from jax.experimental.pallas import tpu as pltpu

_LANES = 128
_SINGLE_BLOCK_MAX_ROWS = 1024     # below this, one full-array block
_MAX_BLOCK_BYTES = 6 << 20        # per-array block cap (v7x VMEM headroom)
_VMEM_LIMIT_BYTES = 32 << 20      # explicit scoped-VMEM budget


def _make_swish_kernel(beta: float):
    half_beta = 0.5 * float(beta)   # Python floats only -> compile-time literals

    def _swish_kernel(x_ref, o_ref):
        # Compute in f32 regardless of storage dtype (free: kernel is HBM-bound).
        xf = x_ref[...].astype(jnp.float32)
        # x * sigmoid(beta*x) == 0.5 * x * (tanh(0.5*beta*x) + 1)
        # -> one EUP transcendental per element instead of exp + reciprocal.
        y = 0.5 * xf * (jnp.tanh(half_beta * xf) + 1.0)
        o_ref[...] = y.astype(o_ref.dtype)

    return _swish_kernel


def _swish_jnp(x, beta: float):
    """Plain-JAX swish for tiny ragged tails (same math as the kernel)."""
    xf = x.astype(jnp.float32)
    return (0.5 * xf * (jnp.tanh(0.5 * beta * xf) + 1.0)).astype(x.dtype)


@functools.partial(jax.jit, static_argnames=("beta", "block_bytes"))
def swish(x: jax.Array, beta: float = 1.0, *, block_bytes: int = 4 << 20) -> jax.Array:
    """Elementwise swish (x * sigmoid(beta*x)) via a Pallas TPU kernel.

    Works for any input shape/dtype; returns the exact input shape/dtype.
    `block_bytes` is the per-array pipeline block size (default 4 MiB).
    """
    orig_shape = x.shape
    orig_dtype = x.dtype
    n = x.size
    beta = float(beta)

    if n == 0:
        return x

    x_flat = jnp.reshape(x, (-1,))
    n_main = (n // _LANES) * _LANES
    tail_n = n - n_main

    if n_main == 0:
        # Fewer than 128 elements: a kernel launch isn't worth it.
        return jnp.reshape(_swish_jnp(x_flat, beta), orig_shape)

    rows = n_main // _LANES
    x_main = x_flat[:n_main] if tail_n else x_flat
    x2d = jnp.reshape(x_main, (rows, _LANES))

    itemsize = jnp.dtype(orig_dtype).itemsize
    block_bytes = min(int(block_bytes), _MAX_BLOCK_BYTES)

    if rows <= _SINGLE_BLOCK_MAX_ROWS:
        # Small input: one full-array block (always a legal tile shape).
        br = rows
    else:
        # Byte-based block sizing (multiple of 32 rows -> legal for
        # f32/bf16/int8 sublane packing), but force >= 4 grid steps so both
        # v7x TensorCores get work and the DMA pipeline overlaps.
        br_bytes = max(32, (block_bytes // (_LANES * itemsize)) // 32 * 32)
        br_quarter = max(32, (pl.cdiv(rows, 4) // 32) * 32)
        br = min(br_bytes, br_quarter)
    grid = (pl.cdiv(rows, br),)

    out2d = pl.pallas_call(
        _make_swish_kernel(beta),
        out_shape=jax.ShapeDtypeStruct((rows, _LANES), orig_dtype),
        grid=grid,
        in_specs=[pl.BlockSpec((br, _LANES), lambda i: (i, 0))],
        out_specs=pl.BlockSpec((br, _LANES), lambda i: (i, 0)),
        compiler_params=pltpu.CompilerParams(
            dimension_semantics=("parallel",),
            vmem_limit_bytes=_VMEM_LIMIT_BYTES,
        ),
    )(x2d)

    out_main = jnp.reshape(out2d, (n_main,))
    if tail_n:
        out_tail = _swish_jnp(x_flat[n_main:], beta)
        out_flat = jnp.concatenate([out_main, out_tail])
    else:
        out_flat = out_main
    return jnp.reshape(out_flat, orig_shape)


if __name__ == "__main__":
    key = jax.random.PRNGKey(0)
    # Small NCHW input, consistent with the module's typical use.
    x = jax.random.normal(key, (2, 4, 16, 16), dtype=jnp.float32)

    beta = 1.0
    y = jax.block_until_ready(swish(x, beta=beta))

    # Reference check in plain JAX.
    y_ref = x * jax.nn.sigmoid(beta * x)
    assert y.shape == x.shape and y.dtype == x.dtype
    assert jnp.allclose(y, y_ref, atol=1e-5, rtol=1e-5)

    # Non-128-aligned total size (kernel on aligned prefix + jnp tail).
    x2 = jax.random.normal(jax.random.PRNGKey(1), (3, 5, 17), dtype=jnp.float32)
    y2 = jax.block_until_ready(swish(x2, beta=0.75))
    y2_ref = x2 * jax.nn.sigmoid(0.75 * x2)
    assert y2.shape == x2.shape and jnp.allclose(y2, y2_ref, atol=1e-5, rtol=1e-5)

    # bf16 input path.
    x3 = jax.random.normal(jax.random.PRNGKey(2), (2, 4, 16, 16)).astype(jnp.bfloat16)
    y3 = jax.block_until_ready(swish(x3, beta=1.0))
    x3f = x3.astype(jnp.float32)
    y3_ref = (x3f * jax.nn.sigmoid(x3f)).astype(jnp.bfloat16)
    assert y3.dtype == jnp.bfloat16
    assert jnp.allclose(y3.astype(jnp.float32), y3_ref.astype(jnp.float32),
                        atol=1e-2, rtol=1e-2)

    # Larger input to exercise the multi-block (>= 4 grid steps) path.
    x4 = jax.random.normal(jax.random.PRNGKey(3), (4, 16, 64, 64), dtype=jnp.float32)
    y4 = jax.block_until_ready(swish(x4, beta=1.0))
    y4_ref = x4 * jax.nn.sigmoid(x4)
    assert jnp.allclose(y4, y4_ref, atol=1e-5, rtol=1e-5)

    print("KERNEL_OK")
</pallas_src>

<mosaic_0001>
module attributes {stable_mosaic.version = 11 : i64} {
  func.func @_swish_kernel(%arg0: i32, %arg1: memref<16x128xf32, #tpu.memory_space<vmem>>, %arg2: memref<16x128xf32, #tpu.memory_space<vmem>>) attributes {dimension_semantics = [#tpu.dimension_semantics<parallel>], iteration_bounds = array<i64: 1>, scalar_prefetch = 0 : i64, scratch_operands = 0 : i64, tpu.core_type = #tpu.core_type<tc>, window_params = [{transform_indices = @transform_0, window_bounds = array<i64: 16, 128>}, {transform_indices = @transform_1, window_bounds = array<i64: 16, 128>}]} {
    %c0 = arith.constant 0 : index
    %c0_0 = arith.constant 0 : index
    %0 = vector.load %arg1[%c0, %c0_0] : memref<16x128xf32, #tpu.memory_space<vmem>>, vector<16x128xf32>
    %cst = arith.constant 5.000000e-01 : f32
    %1 = vector.broadcast %cst : f32 to vector<16x128xf32>
    %2 = arith.mulf %1, %0 : vector<16x128xf32>
    %cst_1 = arith.constant 5.000000e-01 : f32
    %3 = vector.broadcast %cst_1 : f32 to vector<16x128xf32>
    %4 = arith.mulf %3, %0 : vector<16x128xf32>
    %5 = math.tanh %4 : vector<16x128xf32>
    %cst_2 = arith.constant 1.000000e+00 : f32
    %6 = vector.broadcast %cst_2 : f32 to vector<16x128xf32>
    %7 = arith.addf %5, %6 : vector<16x128xf32>
    %8 = arith.mulf %2, %7 : vector<16x128xf32>
    %c0_3 = arith.constant 0 : index
    %c0_4 = arith.constant 0 : index
    %9 = vector.load %arg2[%c0_3, %c0_4] : memref<16x128xf32, #tpu.memory_space<vmem>>, vector<16x128xf32>
    tpu.vector_store %arg2[%c0_3, %c0_4], %8 {strides = array<i32>} : memref<16x128xf32, #tpu.memory_space<vmem>>, vector<16x128xf32>,
    return
  }
  func.func @transform_0(%arg0: i32) -> (i32, i32) {
    %c0_i32 = arith.constant 0 : i32
    %c0_i32_0 = arith.constant 0 : i32
    return %arg0, %c0_i32 : i32, i32
  }
  func.func @transform_1(%arg0: i32) -> (i32, i32) {
    %c0_i32 = arith.constant 0 : i32
    %c0_i32_0 = arith.constant 0 : i32
    return %arg0, %c0_i32 : i32, i32
  }
}

</mosaic_0001>

<llo_original>
// kernel: swish.1
$region0: #{swish.1}
  #allocation0 [shape = 'u32[]', space=smem, size = 0x4, offset = 0x4, fixed_abs, tag = 'smem constant byte address 0x4 - core index']
  #allocation1 [shape = 'u32[144,128]{1,0:T(1,128)}', space=vmem, size = 0x12000, scoped, tag = 'internal scratch']
  %s0 = inlined_call_operand.vmem [shape: f32[16,128], index: 0, kind: input, shape index: {}]
  %s1 = inlined_call_operand.vmem [shape: f32[16,128], index: 1, kind: output, shape index: {}]
  %s2 = sld [smem:[#allocation0]]
  $region14: #{swish.1} parent=0
    _
  %s4 = ssub.s32 1, %s2
  %s5 = scalar_select 0, %s4, %s2
  // Predicated region
  $region2: #{swish.1} parent=0 // pred_check
    _
  $region3: #{swish.1} parent=0 // pred_check_branch
    %7 = sbr.rel (0) target = $region5
  $region4: #{swish.1} parent=0 // pred_region
    _
  $region5: #{swish.1} parent=0 // pred_fallthru
    _
  %v8 = vld [vmem:[%s0] sm:$0xff]
  %v9 = vld [vmem:[%s0 + $0x8] sm:$0xff]
  %v10 = vmul.f32 %v8, 0.5
  %v11 = vmul.f32 %v9, 0.5
  %v12 = vtanh.pop %v10
  %v13 = vtanh.pop %v11
  %v14 = vadd.f32 %v12, 1.0
  %v15 = vadd.f32 %v13, 1.0
  %v16 = vmul.f32 %v10, %v14
  %v17 = vmul.f32 %v11, %v15
  %18 = vst [vmem:[%s1] sm:$0xff] %v16
  %19 = vst [vmem:[%s1 + $0x8] sm:$0xff] %v17
  // Predicated region
  $region6: #{swish.1} parent=0 // pred_check
    _
  $region7: #{swish.1} parent=0 // pred_check_branch
    %21 = sbr.rel (0) target = $region9
  $region8: #{swish.1} parent=0 // pred_region
    _
  $region9: #{swish.1} parent=0 // pred_fallthru
    _
  // Predicated region
  $region10: #{swish.1} parent=0 // pred_check
    _
  $region11: #{swish.1} parent=0 // pred_check_branch
    %23 = sbr.rel (0) target = $region13
  $region12: #{swish.1} parent=0 // pred_region
    _
  $region13: #{swish.1} parent=0 // pred_fallthru
    _

</llo_original>
